<compile_context>
chip_gen: v7x
topology: tpu7x:2x2x1
jax: 0.10.0
libtpu: 0.0.40
codegen_flags: <defaults>
</compile_context>

<pallas_src>
import jax
import jax.numpy as jnp
from jax.experimental import pallas as pl
from jax.experimental.pallas import tpu as pltpu


# ----------------------------------------------------------------------------
# Recommended path: Stack == free row-major reshape (no kernel, no HBM traffic)
# ----------------------------------------------------------------------------
def stack_forward(x, channels, height, width):
    """Exact equivalent of Stack.forward: a zero-cost row-major view."""
    return x.reshape(x.shape[0], channels, height, width)


# ----------------------------------------------------------------------------
# Pallas-kernel path (only if the op must be materialized as a kernel):
# direct HBM -> HBM DMA copy, no VMEM staging.
# ----------------------------------------------------------------------------
def _make_stack_dma_kernel(tm, rem):
    """Build the per-grid-step DMA kernel. `tm`/`rem` are static Python ints."""

    def kernel(x_hbm, o_hbm, sem):
        i = pl.program_id(0)
        start = i * tm

        def copy(rows):
            cp = pltpu.make_async_copy(
                x_hbm.at[pl.ds(start, rows), :],
                o_hbm.at[pl.ds(start, rows), :],
                sem,
            )
            cp.start()
            cp.wait()

        if rem == 0:
            copy(tm)
        else:
            last = pl.num_programs(0) - 1

            @pl.when(i != last)
            def _():
                copy(tm)

            @pl.when(i == last)
            def _():
                copy(rem)  # static-size partial slab: no OOB DMA

    return kernel


def stack_forward_pallas(x, channels, height, width, *,
                         target_step_bytes=16 * 1024 * 1024):
    """Pallas equivalent of Stack.forward as an explicit HBM->HBM DMA copy.

    Tiling decisions:
      * Each grid step DMAs a contiguous (tm, n) row slab HBM->HBM.  No VMEM
        staging, so slab size is bounded only by how much we want each DMA to
        move (~`target_step_bytes`, big enough to amortize the ~0.35 us
        per-step overhead), not by any VMEM budget — safe on all generations.
      * Grid has >= 2 steps whenever B >= 2 so v7x's two TensorCores both
        issue DMAs ("parallel" axis); v5e/v6e (1 TC) just loop.
      * tm is rounded to the dtype's packed-sublane multiple when possible.
    """
    b = x.shape[0]
    n = channels * height * width
    # glue: row-major flatten (no-op when x is already (B, C*H*W)).
    x_flat = x.reshape(b, n)

    itemsize = jnp.dtype(x_flat.dtype).itemsize
    row_bytes = n * itemsize
    sublane = {1: 32, 2: 16, 4: 8}.get(itemsize, 8)

    # Rows per DMA step: big enough to amortize per-step overhead ...
    tm = max(1, target_step_bytes // row_bytes)
    # ... but force >= 2 grid steps for v7x's two TensorCores.
    if b >= 2:
        tm = min(tm, (b + 1) // 2)
    tm = min(tm, b)
    # Round down to the packed-sublane multiple when we can.
    if tm >= sublane:
        tm = (tm // sublane) * sublane
    tm = max(1, tm)

    rem = b % tm  # static remainder handled inside the kernel
    grid = (pl.cdiv(b, tm),)

    out_flat = pl.pallas_call(
        _make_stack_dma_kernel(tm, rem),
        out_shape=jax.ShapeDtypeStruct((b, n), x_flat.dtype),
        grid_spec=pltpu.PrefetchScalarGridSpec(
            num_scalar_prefetch=0,
            grid=grid,
            in_specs=[pl.BlockSpec(memory_space=pl.ANY)],   # raw HBM ref
            out_specs=pl.BlockSpec(memory_space=pl.ANY),    # raw HBM ref
            scratch_shapes=[pltpu.SemaphoreType.DMA],
        ),
        compiler_params=pltpu.CompilerParams(
            # Parallel row axis: shards the DMA work across both TCs on v7x.
            dimension_semantics=("parallel",),
            # Output is written via manual DMA, invisible to the tracer.
            has_side_effects=True,
        ),
    )(x_flat)

    # glue: the actual .view(B, C, H, W) — a free row-major reshape.
    return out_flat.reshape(b, channels, height, width)


if __name__ == "__main__":
    # Shapes consistent with the module: B=2, C=4, H=16, W=16 (flat input B x 1024).
    B, C, H, W = 2, 4, 16, 16
    n = C * H * W
    key = jax.random.PRNGKey(0)
    x = jax.random.normal(key, (B, n), dtype=jnp.float32)
    ref = x.reshape(B, C, H, W)

    # Recommended (kernel-free) path.
    y0 = jax.block_until_ready(stack_forward(x, C, H, W))
    assert y0.shape == (B, C, H, W) and y0.dtype == x.dtype
    assert bool(jnp.array_equal(y0, ref))

    # Pallas DMA path: 2-step parallel grid (1 row per step at B=2).
    y1 = jax.block_until_ready(stack_forward_pallas(x, C, H, W))
    assert y1.shape == (B, C, H, W) and y1.dtype == x.dtype
    assert bool(jnp.array_equal(y1, ref))

    # bf16, larger batch: sublane-packed (16-row) DMA slabs, 2-step grid, no remainder.
    B2 = 32
    x2 = jax.random.normal(jax.random.PRNGKey(0), (B2, n), dtype=jnp.bfloat16)
    y2 = jax.block_until_ready(stack_forward_pallas(x2, C, H, W))
    assert bool(jnp.array_equal(y2, x2.reshape(B2, C, H, W)))

    # Odd batch: exercises the static-remainder DMA branch (last step copies 3 rows).
    B3 = 7
    x3 = jax.random.normal(jax.random.PRNGKey(0), (B3, n), dtype=jnp.float32)
    y3 = jax.block_until_ready(stack_forward_pallas(x3, C, H, W))
    assert bool(jnp.array_equal(y3, x3.reshape(B3, C, H, W)))

    print("KERNEL_OK")
</pallas_src>

<mosaic_0001>
module attributes {stable_mosaic.version = 11 : i64} {
  func.func @kernel(%arg0: i32, %arg1: memref<2x1024xf32, #tpu.memory_space<any>>, %arg2: memref<2x1024xf32, #tpu.memory_space<any>>, %arg3: memref<!tpu.dma_semaphore, #tpu.memory_space<semaphore_mem>>) attributes {dimension_semantics = [#tpu.dimension_semantics<parallel>], iteration_bounds = array<i64: 2>, scalar_prefetch = 0 : i64, scratch_operands = 1 : i64, tpu.core_type = #tpu.core_type<tc>, window_params = [{}, {}]} {
    %c1_i32 = arith.constant 1 : i32
    %0 = arith.muli %arg0, %c1_i32 : i32
    %c0_i32 = arith.constant 0 : i32
    %1 = tpu.memref_slice %arg1[%0, %c0_i32] : memref<2x1024xf32, #tpu.memory_space<any>> -> memref<1x1024xf32, #tpu.memory_space<any>>
    %c0_i32_0 = arith.constant 0 : i32
    %2 = tpu.memref_slice %arg2[%0, %c0_i32_0] : memref<2x1024xf32, #tpu.memory_space<any>> -> memref<1x1024xf32, #tpu.memory_space<any>>
    tpu.enqueue_dma source(%1 : memref<1x1024xf32, #tpu.memory_space<any>>) target(%2 : memref<1x1024xf32, #tpu.memory_space<any>>) target_semaphore(%arg3 : memref<!tpu.dma_semaphore, #tpu.memory_space<semaphore_mem>>)
    %c0_i32_1 = arith.constant 0 : i32
    %3 = tpu.memref_slice %arg1[%0, %c0_i32_1] : memref<2x1024xf32, #tpu.memory_space<any>> -> memref<1x1024xf32, #tpu.memory_space<any>>
    %c0_i32_2 = arith.constant 0 : i32
    %4 = tpu.memref_slice %arg2[%0, %c0_i32_2] : memref<2x1024xf32, #tpu.memory_space<any>> -> memref<1x1024xf32, #tpu.memory_space<any>>
    tpu.wait_dma2 semaphore(%arg3 : memref<!tpu.dma_semaphore, #tpu.memory_space<semaphore_mem>>) src(%3 : memref<1x1024xf32, #tpu.memory_space<any>>) dst(%4 : memref<1x1024xf32, #tpu.memory_space<any>>)
    return
  }
}

</mosaic_0001>

<llo_original>
// kernel: tpu_custom_call.1
$region0: #{tpu_custom_call.1}
  #allocation0 [shape = 'u32[]', space=smem, size = 0x4, offset = 0x4, fixed_abs, tag = 'smem constant byte address 0x4 - core index']
  #allocation1 [shape = 'u32[144,128]{1,0:T(1,128)}', space=vmem, size = 0x12000, scoped, tag = 'internal scratch']
  #allocation2 [shape = 's32[1]{0}', space=sflag, size = 0x4, scoped, tag = 'scratch operand']
  #allocation3 [shape = 's32[]', space=sflag, size = 0x4, offset = 0, fixed_abs, tag = 'sflag constant byte address 0x0 - dummy sync flag']
  %s0 = inlined_call_operand.hbm [shape: f32[2,1024], index: 0, kind: input, shape index: {}]
  %s1 = inlined_call_operand.hbm [shape: f32[2,1024], index: 1, kind: output, shape index: {}]
  %s2 = sld [smem:[#allocation0]]
  $region9: #{tpu_custom_call.1} parent=0
    _
  %s4 = ssub.s32 1, %s2
  %s5 = scalar_select 0, %s4, %s2
  loop: start=0, step=1, limit=2
  $region2: #{tpu_custom_call.1} parent=0 // loop_pre_header
    _
  $region3: #{tpu_custom_call.1} parent=0 // loop_header
    %s7 = sphi 0, %s11
    %p8 = scmp.ge.s32.totalorder %s7, 2
  $region4: #{tpu_custom_call.1} parent=0 // loop_header_branch
    %10 = sbr.rel (%p8) target = $region8
  $region5: #{tpu_custom_call.1} parent=0 // loop_body
    #allocation4 [shape = 'u32[3]{0}', space=smem, size = 0xc, scoped, tag = 'DMA stride descriptor']
    %s12 = sadd.s32 %s7, 1
    %s13 = sshrl.u32 %s7, 1
    %s14 = sand.u32 %s7, 1
    %s15 = smul.u32 %s13, 16
    %s16 = sadd.s32 %s14, %s15
    %s17 = smul.addr %s16, 16
    %s18 = scalar_lea.hbm %s0, %s17
    %s19 = smul.addr %s16, 16
    %s20 = scalar_lea.hbm %s1, %s19
    %s22 = sshll.u32 1, 14
    %s23 = sxor.u32 4294967295, %s22
    %s26 = sshll.u32 3, 24
    %s27 = sxor.u32 4294967295, %s26
    %s28 = sand.u32 0, %s27
    %s30 = sor.u32 %s28, 0
    %33 = sst [smem:[#allocation4]] 32
    %s34 = scalar_lea.smem [#allocation4], 1
    %35 = sst [smem:[%s34]] 32
    %s36 = scalar_lea.smem [#allocation4], 2
    %37 = sst [smem:[%s36]] 1
    %39 = dma.general %s18, 128, %s20, [#allocation2], [#allocation3], [#allocation4], %s30, 0
    %s40 = smul.u32 1, 8
    %s41 = sshll.u32 %s40, 4
    %42 = dma.done [#allocation2], %s41
  $region6: #{tpu_custom_call.1} parent=0 // loop_footer
    %s11 = sadd.s32 1, %s7
  $region7: #{tpu_custom_call.1} parent=0 // loop_footer_branch
    %6 = sbr.rel target = $region3
  $region8: #{tpu_custom_call.1} parent=0 // loop_exit
    _
  %43 = vsyncmov [#allocation2]
  %s44 = vpop.sfrf %43
  %p45 = scmp.eq.s32.totalorder %s44, 0
  %p46 = pneg %p45
  %48 = shalt.err (%p46)

</llo_original>
